<compile_context>
chip_gen: v5e
topology: v5e:2x2
jax: 0.10.0
libtpu: 0.0.40
codegen_flags: <defaults>
</compile_context>

<pallas_src>
import functools

import jax
import jax.numpy as jnp
from jax import lax
from jax.experimental import pallas as pl
from jax.experimental.pallas import tpu as pltpu

DROPOUT_P = 0.3
QUERY_DIM = 1
VALUE_DIM = 1                       # unused by the forward pass; kept for parity
SCALE = QUERY_DIM ** (-0.5)         # == 1.0 for the spec's query_dim=1


def _i32(v):
    """Python int -> int32 constant with two's-complement wrapping."""
    v &= 0xFFFFFFFF
    if v >= (1 << 31):
        v -= 1 << 32
    return jnp.int32(v)


def _shr(x, n):
    """Logical (unsigned) right shift on int32 bit patterns."""
    return lax.shift_right_logical(x, jnp.int32(n))


def _hash_bits(lin, seed):
    """murmur3 fmix32 of (lin, seed); all wrapping int32 VPU ops."""
    x = lin * _i32(0x9E3779B9) + seed * _i32(0x3243F6A9)
    x = x ^ _shr(x, 16)
    x = x * _i32(0x85EBCA6B)
    x = x ^ _shr(x, 13)
    x = x * _i32(0xC2B2AE35)
    x = x ^ _shr(x, 16)
    return x


def _attn_dropout_kernel(seed_ref, q_ref, kt_ref, v_ref, o_ref, *,
                         dropout_p, scale, batch_block, use_hw_prng):
    bt, lq, _ = q_ref.shape
    lk = kt_ref.shape[2]

    if dropout_p > 0.0:
        # Drop iff the uniform int32 bit pattern < p*2**32 (signed-shifted
        # threshold so the compare stays in the integer domain).
        thresh = _i32(int(round(dropout_p * 4294967296.0)) - (1 << 31))
        if use_hw_prng:
            pltpu.prng_seed(seed_ref[0] + pl.program_id(0))
        else:
            # Fallback (off-TPU / interpret): one shared 2-D index grid plus a
            # per-batch scalar offset instead of three 3-D iotas.
            qi = lax.broadcasted_iota(jnp.int32, (lq, lk), 0)
            ki = lax.broadcasted_iota(jnp.int32, (lq, lk), 1)
            lin2d = qi * _i32(lk) + ki
            seed = seed_ref[0]

    # Static unroll over the (tiny) batch slab: clean 2-D MXU dots.
    for b in range(bt):
        q = q_ref[b]          # (Lq, D)
        kt = kt_ref[b]        # (D, Lk) -- key pre-transposed wrapper-side
        v = v_ref[b]          # (Lk, Dv)

        # Fold the scale into the small q tile (compile-time constant;
        # skipped entirely when scale == 1, as for query_dim=1).
        if scale != 1.0:
            q = q * jnp.float32(scale)

        s = jnp.dot(q, kt, preferred_element_type=jnp.float32)     # (Lq, Lk)

        # ---- softmax over the last dim (exact reciprocal for parity) ----
        m = jnp.max(s, axis=-1, keepdims=True)
        e = jnp.exp(s - m)
        inv = pl.reciprocal(jnp.sum(e, axis=-1, keepdims=True), approx=False)
        if dropout_p > 0.0:
            # Fold the inverted-dropout rescale 1/(1-p) into the reciprocal.
            inv = inv * jnp.float32(1.0 / (1.0 - dropout_p))
        p = e * inv

        if dropout_p > 0.0:
            if use_hw_prng:
                bits = pltpu.prng_random_bits((lq, lk))
                if bits.dtype != jnp.int32:
                    bits = pltpu.bitcast(bits, jnp.int32)
            else:
                # TODO(synk): counter-hash fallback; deterministic per
                # (seed, batch, q, k) but not bit-exact with torch's RNG stream.
                bg = pl.program_id(0) * batch_block + b
                bits = _hash_bits(lin2d + bg * _i32(lq * lk), seed)
            p = jnp.where(bits < thresh, jnp.float32(0.0), p)

        o_ref[b] = jnp.dot(p, v, preferred_element_type=jnp.float32
                           ).astype(o_ref.dtype)


def attention_with_dropout(query, key, value, seed,
                           dropout_p=DROPOUT_P, scale=SCALE,
                           batch_block=None, use_hw_prng=None):
    B, Lq, D = query.shape
    Bk, Lk, Dk = key.shape
    Bv, Lkv, Dv = value.shape
    assert (Bk, Dk) == (B, D) and (Bv, Lkv) == (B, Lk)

    # Default: the whole batch in one grid step (grid=(1,)) — the problem is
    # fixed-overhead bound at these shapes.
    bt = B if batch_block is None else min(int(batch_block), B)
    assert B % bt == 0, "batch_block must divide the batch size"
    grid = (B // bt,)

    if use_hw_prng is None:
        use_hw_prng = (jax.default_backend() == "tpu")

    # XLA-side transpose so the kernel never relayouts K (and the K tile is
    # lane-dense: Lk on the lane axis).
    key_t = jnp.swapaxes(key, -1, -2)                 # (B, D, Lk)

    kernel = functools.partial(_attn_dropout_kernel,
                               dropout_p=float(dropout_p),
                               scale=float(scale),
                               batch_block=bt,
                               use_hw_prng=bool(use_hw_prng))

    grid_spec = pltpu.PrefetchScalarGridSpec(
        num_scalar_prefetch=1,            # seed -> SMEM
        grid=grid,
        in_specs=[
            pl.BlockSpec((bt, Lq, D),  lambda b, seed: (b, 0, 0)),
            pl.BlockSpec((bt, D, Lk),  lambda b, seed: (b, 0, 0)),
            pl.BlockSpec((bt, Lk, Dv), lambda b, seed: (b, 0, 0)),
        ],
        out_specs=pl.BlockSpec((bt, Lq, Dv), lambda b, seed: (b, 0, 0)),
    )

    cost = pl.CostEstimate(
        flops=2 * B * Lq * Lk * (D + Dv),
        transcendentals=B * Lq * Lk,
        bytes_accessed=4 * (query.size + key.size + value.size + B * Lq * Dv),
    )

    # TODO(synk): if Lk or B grow enough to pressure VMEM (first on v7x's
    # 64 MiB), switch to K/V tiling with online softmax rather than raising
    # vmem_limit_bytes.
    return pl.pallas_call(
        kernel,
        out_shape=jax.ShapeDtypeStruct((B, Lq, Dv), query.dtype),
        grid_spec=grid_spec,
        cost_estimate=cost,
        compiler_params=pltpu.CompilerParams(
            # With a single grid step, TC sharding is pure overhead; only
            # mark the batch axis parallel when there is real work to split.
            dimension_semantics=(("arbitrary",) if grid[0] == 1
                                 else ("parallel",))),
    )(seed, query, key_t, value)


if __name__ == "__main__":
    # Shapes from the PyTorch spec: query (2,5,10), key (2,100,10), value (2,100,20)
    B, Lq, Lk, D, Dv = 2, 5, 100, 10, 20

    k0, k1, k2 = jax.random.split(jax.random.PRNGKey(0), 3)
    query = jax.random.normal(k0, (B, Lq, D), dtype=jnp.float32)
    key = jax.random.normal(k1, (B, Lk, D), dtype=jnp.float32)
    value = jax.random.normal(k2, (B, Lk, Dv), dtype=jnp.float32)
    seed = jnp.array([1234], dtype=jnp.int32)

    out = attention_with_dropout(query, key, value, seed,
                                 dropout_p=DROPOUT_P, scale=SCALE)
    out = jax.block_until_ready(out)
    assert out.shape == (B, Lq, Dv)
    assert bool(jnp.all(jnp.isfinite(out)))

    # Sanity check: with dropout disabled (compile-time gated), the kernel must
    # match plain softmax attention.
    out_nodrop = jax.block_until_ready(
        attention_with_dropout(query, key, value, seed, dropout_p=0.0,
                               scale=SCALE))
    s_ref = jnp.einsum("bqd,bkd->bqk", query, key) * SCALE
    p_ref = jax.nn.softmax(s_ref, axis=-1)
    ref = jnp.einsum("bqk,bkv->bqv", p_ref, value)
    assert jnp.allclose(out_nodrop, ref, atol=1e-4, rtol=1e-4)

    # Dropout must actually perturb the output (p(all-keep) ~ 0.7**1000).
    assert not bool(jnp.allclose(out, out_nodrop))

    print("KERNEL_OK")
</pallas_src>

<mosaic_0001>
module attributes {stable_mosaic.version = 11 : i64} {
  func.func @_attn_dropout_kernel(%arg0: i32, %arg1: memref<1xi32, #tpu.memory_space<smem>>, %arg2: memref<2x5x10xf32, #tpu.memory_space<vmem>>, %arg3: memref<2x10x100xf32, #tpu.memory_space<vmem>>, %arg4: memref<2x100x20xf32, #tpu.memory_space<vmem>>, %arg5: memref<2x5x20xf32, #tpu.memory_space<vmem>>) attributes {dimension_semantics = [#tpu.dimension_semantics<arbitrary>], iteration_bounds = array<i64: 1>, scalar_prefetch = 1 : i64, scratch_operands = 0 : i64, tpu.core_type = #tpu.core_type<tc>, window_params = [{transform_indices = @transform_0, window_bounds = array<i64: 2, 5, 10>}, {transform_indices = @transform_1, window_bounds = array<i64: 2, 10, 100>}, {transform_indices = @transform_2, window_bounds = array<i64: 2, 100, 20>}, {transform_indices = @transform_3, window_bounds = array<i64: 2, 5, 20>}]} {
    %0 = tpu.iota {dimensions = array<i32: 0>} : vector<5x100xi32>
    %1 = tpu.iota {dimensions = array<i32: 1>} : vector<5x100xi32>
    %c100_i32 = arith.constant 100 : i32
    %2 = vector.broadcast %c100_i32 : i32 to vector<5x100xi32>
    %3 = arith.muli %0, %2 : vector<5x100xi32>
    %4 = arith.addi %3, %1 : vector<5x100xi32>
    %c0 = arith.constant 0 : index
    %5 = memref.load %arg1[%c0] : memref<1xi32, #tpu.memory_space<smem>>
    %c0_0 = arith.constant 0 : index
    %c0_1 = arith.constant 0 : index
    %c0_2 = arith.constant 0 : index
    %6 = vector.load %arg2[%c0_0, %c0_1, %c0_2] : memref<2x5x10xf32, #tpu.memory_space<vmem>>, vector<1x5x10xf32>
    %7 = vector.shape_cast %6 : vector<1x5x10xf32> to vector<5x10xf32>
    %c0_3 = arith.constant 0 : index
    %c0_4 = arith.constant 0 : index
    %c0_5 = arith.constant 0 : index
    %8 = vector.load %arg3[%c0_3, %c0_4, %c0_5] : memref<2x10x100xf32, #tpu.memory_space<vmem>>, vector<1x10x100xf32>
    %9 = vector.shape_cast %8 : vector<1x10x100xf32> to vector<10x100xf32>
    %c0_6 = arith.constant 0 : index
    %c0_7 = arith.constant 0 : index
    %c0_8 = arith.constant 0 : index
    %10 = vector.load %arg4[%c0_6, %c0_7, %c0_8] : memref<2x100x20xf32, #tpu.memory_space<vmem>>, vector<1x100x20xf32>
    %11 = vector.shape_cast %10 : vector<1x100x20xf32> to vector<100x20xf32>
    %cst = arith.constant dense<0.000000e+00> : vector<5x100xf32>
    %12 = tpu.matmul %7, %9, %cst {dimension_numbers = #tpu.dot_dimension_numbers<[1], [0], [0], [1], [0, 0, 1, 1], [], []>} : vector<5x10xf32>, vector<10x100xf32>, vector<5x100xf32> -> vector<5x100xf32>
    %cst_9 = arith.constant dense<0xFF800000> : vector<5xf32>
    %13 = vector.multi_reduction <maximumf>, %12, %cst_9 [1] : vector<5x100xf32> to vector<5xf32>
    %14 = vector.shape_cast %13 : vector<5xf32> to vector<5x1xf32>
    %15 = vector.broadcast %14 : vector<5x1xf32> to vector<5x100xf32>
    %16 = arith.subf %12, %15 : vector<5x100xf32>
    %17 = math.exp %16 : vector<5x100xf32>
    %cst_10 = arith.constant dense<0.000000e+00> : vector<5xf32>
    %18 = vector.multi_reduction <add>, %17, %cst_10 [1] : vector<5x100xf32> to vector<5xf32>
    %19 = vector.shape_cast %18 : vector<5xf32> to vector<5x1xf32>
    %20 = tpu.reciprocal %19 : vector<5x1xf32> -> vector<5x1xf32>
    %cst_11 = arith.constant 1.42857146 : f32
    %21 = vector.broadcast %cst_11 : f32 to vector<5x1xf32>
    %22 = arith.mulf %20, %21 : vector<5x1xf32>
    %23 = vector.broadcast %22 : vector<5x1xf32> to vector<5x100xf32>
    %24 = arith.mulf %17, %23 : vector<5x100xf32>
    %c2_i32 = arith.constant 2 : i32
    %25 = arith.muli %arg0, %c2_i32 : i32
    %c0_i32 = arith.constant 0 : i32
    %26 = arith.addi %25, %c0_i32 : i32
    %c500_i32 = arith.constant 500 : i32
    %27 = arith.muli %26, %c500_i32 : i32
    %28 = vector.broadcast %27 : i32 to vector<5x100xi32>
    %29 = arith.addi %4, %28 : vector<5x100xi32>
    %c-1640531527_i32 = arith.constant -1640531527 : i32
    %30 = vector.broadcast %c-1640531527_i32 : i32 to vector<5x100xi32>
    %31 = arith.muli %29, %30 : vector<5x100xi32>
    %c843314857_i32 = arith.constant 843314857 : i32
    %32 = arith.muli %5, %c843314857_i32 : i32
    %33 = vector.broadcast %32 : i32 to vector<5x100xi32>
    %34 = arith.addi %31, %33 : vector<5x100xi32>
    %c16_i32 = arith.constant 16 : i32
    %35 = vector.broadcast %c16_i32 : i32 to vector<5x100xi32>
    %36 = arith.shrui %34, %35 : vector<5x100xi32>
    %37 = arith.xori %34, %36 : vector<5x100xi32>
    %c-2048144789_i32 = arith.constant -2048144789 : i32
    %38 = vector.broadcast %c-2048144789_i32 : i32 to vector<5x100xi32>
    %39 = arith.muli %37, %38 : vector<5x100xi32>
    %c13_i32 = arith.constant 13 : i32
    %40 = vector.broadcast %c13_i32 : i32 to vector<5x100xi32>
    %41 = arith.shrui %39, %40 : vector<5x100xi32>
    %42 = arith.xori %39, %41 : vector<5x100xi32>
    %c-1028477387_i32 = arith.constant -1028477387 : i32
    %43 = vector.broadcast %c-1028477387_i32 : i32 to vector<5x100xi32>
    %44 = arith.muli %42, %43 : vector<5x100xi32>
    %c16_i32_12 = arith.constant 16 : i32
    %45 = vector.broadcast %c16_i32_12 : i32 to vector<5x100xi32>
    %46 = arith.shrui %44, %45 : vector<5x100xi32>
    %47 = arith.xori %44, %46 : vector<5x100xi32>
    %c-858993459_i32 = arith.constant -858993459 : i32
    %48 = vector.broadcast %c-858993459_i32 : i32 to vector<5x100xi32>
    %49 = arith.cmpi slt, %47, %48 : vector<5x100xi32>
    %cst_13 = arith.constant 0.000000e+00 : f32
    %50 = vector.broadcast %cst_13 : f32 to vector<5x100xf32>
    %51 = arith.select %49, %50, %24 : vector<5x100xi1>, vector<5x100xf32>
    %cst_14 = arith.constant dense<0.000000e+00> : vector<5x20xf32>
    %52 = tpu.matmul %51, %11, %cst_14 {dimension_numbers = #tpu.dot_dimension_numbers<[1], [0], [0], [1], [0, 0, 1, 1], [], []>} : vector<5x100xf32>, vector<100x20xf32>, vector<5x20xf32> -> vector<5x20xf32>
    %c0_15 = arith.constant 0 : index
    %c0_16 = arith.constant 0 : index
    %c0_17 = arith.constant 0 : index
    %53 = vector.load %arg5[%c0_15, %c0_16, %c0_17] : memref<2x5x20xf32, #tpu.memory_space<vmem>>, vector<1x5x20xf32>
    %54 = vector.shape_cast %53 : vector<1x5x20xf32> to vector<5x20xf32>
    %55 = vector.shape_cast %52 : vector<5x20xf32> to vector<1x5x20xf32>
    tpu.vector_store %arg5[%c0_15, %c0_16, %c0_17], %55 {strides = array<i32>} : memref<2x5x20xf32, #tpu.memory_space<vmem>>, vector<1x5x20xf32>,
    %c1 = arith.constant 1 : index
    %c0_18 = arith.constant 0 : index
    %c0_19 = arith.constant 0 : index
    %56 = vector.load %arg2[%c1, %c0_18, %c0_19] : memref<2x5x10xf32, #tpu.memory_space<vmem>>, vector<1x5x10xf32>
    %57 = vector.shape_cast %56 : vector<1x5x10xf32> to vector<5x10xf32>
    %c1_20 = arith.constant 1 : index
    %c0_21 = arith.constant 0 : index
    %c0_22 = arith.constant 0 : index
    %58 = vector.load %arg3[%c1_20, %c0_21, %c0_22] : memref<2x10x100xf32, #tpu.memory_space<vmem>>, vector<1x10x100xf32>
    %59 = vector.shape_cast %58 : vector<1x10x100xf32> to vector<10x100xf32>
    %c1_23 = arith.constant 1 : index
    %c0_24 = arith.constant 0 : index
    %c0_25 = arith.constant 0 : index
    %60 = vector.load %arg4[%c1_23, %c0_24, %c0_25] : memref<2x100x20xf32, #tpu.memory_space<vmem>>, vector<1x100x20xf32>
    %61 = vector.shape_cast %60 : vector<1x100x20xf32> to vector<100x20xf32>
    %cst_26 = arith.constant dense<0.000000e+00> : vector<5x100xf32>
    %62 = tpu.matmul %57, %59, %cst_26 {dimension_numbers = #tpu.dot_dimension_numbers<[1], [0], [0], [1], [0, 0, 1, 1], [], []>} : vector<5x10xf32>, vector<10x100xf32>, vector<5x100xf32> -> vector<5x100xf32>
    %cst_27 = arith.constant dense<0xFF800000> : vector<5xf32>
    %63 = vector.multi_reduction <maximumf>, %62, %cst_27 [1] : vector<5x100xf32> to vector<5xf32>
    %64 = vector.shape_cast %63 : vector<5xf32> to vector<5x1xf32>
    %65 = vector.broadcast %64 : vector<5x1xf32> to vector<5x100xf32>
    %66 = arith.subf %62, %65 : vector<5x100xf32>
    %67 = math.exp %66 : vector<5x100xf32>
    %cst_28 = arith.constant dense<0.000000e+00> : vector<5xf32>
    %68 = vector.multi_reduction <add>, %67, %cst_28 [1] : vector<5x100xf32> to vector<5xf32>
    %69 = vector.shape_cast %68 : vector<5xf32> to vector<5x1xf32>
    %70 = tpu.reciprocal %69 : vector<5x1xf32> -> vector<5x1xf32>
    %cst_29 = arith.constant 1.42857146 : f32
    %71 = vector.broadcast %cst_29 : f32 to vector<5x1xf32>
    %72 = arith.mulf %70, %71 : vector<5x1xf32>
    %73 = vector.broadcast %72 : vector<5x1xf32> to vector<5x100xf32>
    %74 = arith.mulf %67, %73 : vector<5x100xf32>
    %c2_i32_30 = arith.constant 2 : i32
    %75 = arith.muli %arg0, %c2_i32_30 : i32
    %c1_i32 = arith.constant 1 : i32
    %76 = arith.addi %75, %c1_i32 : i32
    %c500_i32_31 = arith.constant 500 : i32
    %77 = arith.muli %76, %c500_i32_31 : i32
    %78 = vector.broadcast %77 : i32 to vector<5x100xi32>
    %79 = arith.addi %4, %78 : vector<5x100xi32>
    %c-1640531527_i32_32 = arith.constant -1640531527 : i32
    %80 = vector.broadcast %c-1640531527_i32_32 : i32 to vector<5x100xi32>
    %81 = arith.muli %79, %80 : vector<5x100xi32>
    %c843314857_i32_33 = arith.constant 843314857 : i32
    %82 = arith.muli %5, %c843314857_i32_33 : i32
    %83 = vector.broadcast %82 : i32 to vector<5x100xi32>
    %84 = arith.addi %81, %83 : vector<5x100xi32>
    %c16_i32_34 = arith.constant 16 : i32
    %85 = vector.broadcast %c16_i32_34 : i32 to vector<5x100xi32>
    %86 = arith.shrui %84, %85 : vector<5x100xi32>
    %87 = arith.xori %84, %86 : vector<5x100xi32>
    %c-2048144789_i32_35 = arith.constant -2048144789 : i32
    %88 = vector.broadcast %c-2048144789_i32_35 : i32 to vector<5x100xi32>
    %89 = arith.muli %87, %88 : vector<5x100xi32>
    %c13_i32_36 = arith.constant 13 : i32
    %90 = vector.broadcast %c13_i32_36 : i32 to vector<5x100xi32>
    %91 = arith.shrui %89, %90 : vector<5x100xi32>
    %92 = arith.xori %89, %91 : vector<5x100xi32>
    %c-1028477387_i32_37 = arith.constant -1028477387 : i32
    %93 = vector.broadcast %c-1028477387_i32_37 : i32 to vector<5x100xi32>
    %94 = arith.muli %92, %93 : vector<5x100xi32>
    %c16_i32_38 = arith.constant 16 : i32
    %95 = vector.broadcast %c16_i32_38 : i32 to vector<5x100xi32>
    %96 = arith.shrui %94, %95 : vector<5x100xi32>
    %97 = arith.xori %94, %96 : vector<5x100xi32>
    %c-858993459_i32_39 = arith.constant -858993459 : i32
    %98 = vector.broadcast %c-858993459_i32_39 : i32 to vector<5x100xi32>
    %99 = arith.cmpi slt, %97, %98 : vector<5x100xi32>
    %cst_40 = arith.constant 0.000000e+00 : f32
    %100 = vector.broadcast %cst_40 : f32 to vector<5x100xf32>
    %101 = arith.select %99, %100, %74 : vector<5x100xi1>, vector<5x100xf32>
    %cst_41 = arith.constant dense<0.000000e+00> : vector<5x20xf32>
    %102 = tpu.matmul %101, %61, %cst_41 {dimension_numbers = #tpu.dot_dimension_numbers<[1], [0], [0], [1], [0, 0, 1, 1], [], []>} : vector<5x100xf32>, vector<100x20xf32>, vector<5x20xf32> -> vector<5x20xf32>
    %c1_42 = arith.constant 1 : index
    %c0_43 = arith.constant 0 : index
    %c0_44 = arith.constant 0 : index
    %103 = vector.load %arg5[%c1_42, %c0_43, %c0_44] : memref<2x5x20xf32, #tpu.memory_space<vmem>>, vector<1x5x20xf32>
    %104 = vector.shape_cast %103 : vector<1x5x20xf32> to vector<5x20xf32>
    %105 = vector.shape_cast %102 : vector<5x20xf32> to vector<1x5x20xf32>
    tpu.vector_store %arg5[%c1_42, %c0_43, %c0_44], %105 {strides = array<i32>} : memref<2x5x20xf32, #tpu.memory_space<vmem>>, vector<1x5x20xf32>,
    return
  }
  func.func @transform_0(%arg0: i32, %arg1: memref<1xi32, #tpu.memory_space<smem>>) -> (i32, i32, i32) {
    %c0_i32 = arith.constant 0 : i32
    %c0_i32_0 = arith.constant 0 : i32
    %c0_i32_1 = arith.constant 0 : i32
    return %arg0, %c0_i32, %c0_i32_0 : i32, i32, i32
  }
  func.func @transform_1(%arg0: i32, %arg1: memref<1xi32, #tpu.memory_space<smem>>) -> (i32, i32, i32) {
    %c0_i32 = arith.constant 0 : i32
    %c0_i32_0 = arith.constant 0 : i32
    %c0_i32_1 = arith.constant 0 : i32
    return %arg0, %c0_i32, %c0_i32_0 : i32, i32, i32
  }
  func.func @transform_2(%arg0: i32, %arg1: memref<1xi32, #tpu.memory_space<smem>>) -> (i32, i32, i32) {
    %c0_i32 = arith.constant 0 : i32
    %c0_i32_0 = arith.constant 0 : i32
    %c0_i32_1 = arith.constant 0 : i32
    return %arg0, %c0_i32, %c0_i32_0 : i32, i32, i32
  }
  func.func @transform_3(%arg0: i32, %arg1: memref<1xi32, #tpu.memory_space<smem>>) -> (i32, i32, i32) {
    %c0_i32 = arith.constant 0 : i32
    %c0_i32_0 = arith.constant 0 : i32
    %c0_i32_1 = arith.constant 0 : i32
    return %arg0, %c0_i32, %c0_i32_0 : i32, i32, i32
  }
}

</mosaic_0001>

<llo_original>
// kernel: tpu_custom_call.1
$region0: #{tpu_custom_call.1}
  #allocation0 [shape = 'u32[]', space=smem, size = 0x4, offset = 0x4, fixed_abs, tag = 'smem constant byte address 0x4 - core index']
  #allocation1 [shape = 'u32[72,128]{1,0:T(1,128)}', space=vmem, size = 0x9000, scoped, tag = 'internal scratch']
  #allocation2 [shape = 's32[1]{0}', space=sflag, size = 0x4, scoped, tag = 'scoped memory for tpu_custom_call.1']
  #allocation3 [shape = 's32[1]{0:T(128)S(6)}', space=smem, size = 0x200, scoped, tag = 'prefetched SMEM operand 0']
  %s0 = inlined_call_operand.<no memory space> [shape: s32[1], index: 0, kind: input, shape index: {}]
  %s1 = inlined_call_operand.vmem [shape: f32[2,5,10], index: 1, kind: input, shape index: {}]
  %s2 = inlined_call_operand.vmem [shape: f32[2,10,100], index: 2, kind: input, shape index: {}]
  %s3 = inlined_call_operand.vmem [shape: f32[2,100,20], index: 3, kind: input, shape index: {}]
  %s4 = inlined_call_operand.vmem [shape: f32[2,5,20], index: 4, kind: output, shape index: {}]
  %s5 = sld [smem:[#allocation0]]
  $region22: #{tpu_custom_call.1} parent=0
    _
  %s7 = ssub.s32 1, %s5
  %s8 = scalar_select 0, %s7, %s5
  %9 = sst [smem:[#allocation3]] %s0
  // Predicated region
  $region2: #{tpu_custom_call.1} parent=0 // pred_check
    _
  $region3: #{tpu_custom_call.1} parent=0 // pred_check_branch
    %11 = sbr.rel (0) target = $region5
  $region4: #{tpu_custom_call.1} parent=0 // pred_region
    _
  $region5: #{tpu_custom_call.1} parent=0 // pred_fallthru
    _
  // Predicated region
  $region6: #{tpu_custom_call.1} parent=0 // pred_check
    _
  $region7: #{tpu_custom_call.1} parent=0 // pred_check_branch
    %13 = sbr.rel (0) target = $region9
  $region8: #{tpu_custom_call.1} parent=0 // pred_region
    _
  $region9: #{tpu_custom_call.1} parent=0 // pred_fallthru
    _
  // Predicated region
  $region10: #{tpu_custom_call.1} parent=0 // pred_check
    _
  $region11: #{tpu_custom_call.1} parent=0 // pred_check_branch
    %15 = sbr.rel (0) target = $region13
  $region12: #{tpu_custom_call.1} parent=0 // pred_region
    _
  $region13: #{tpu_custom_call.1} parent=0 // pred_fallthru
    _
  %v16 = vlaneseq
  %v17 = vshrl.u32 %v16, 7
  %v18 = vlaneseq
  %v19 = vand.u32 %v18, 127
  %v20 = vmul.u32 %v17, 100
  %v21 = vadd.s32 %v20, %v19
  %s22 = sld [smem:[#allocation3]]
  %v23 = vld [vmem:[%s1] sm:$0x1f]
  %v24 = vld [vmem:[%s2] sm:$0xff]
  %v25 = vld [vmem:[%s2 + $0x8] sm:$0x3]
  %v26 = vld [vmem:[%s3] sm:$0xff]
  %v27 = vld [vmem:[%s3 + $0x8] sm:$0xff]
  %v28 = vld [vmem:[%s3 + $0x10] sm:$0xff]
  %v29 = vld [vmem:[%s3 + $0x18] sm:$0xff]
  %v30 = vld [vmem:[%s3 + $0x20] sm:$0xff]
  %v31 = vld [vmem:[%s3 + $0x28] sm:$0xff]
  %v32 = vld [vmem:[%s3 + $0x30] sm:$0xff]
  %v33 = vld [vmem:[%s3 + $0x38] sm:$0xff]
  %v34 = vld [vmem:[%s3 + $0x40] sm:$0xff]
  %v35 = vld [vmem:[%s3 + $0x48] sm:$0xff]
  %v36 = vld [vmem:[%s3 + $0x50] sm:$0xff]
  %v37 = vld [vmem:[%s3 + $0x58] sm:$0xff]
  %v38 = vld [vmem:[%s3 + $0x60] sm:$0xf]
  %vm39 = vcmask 80896
  %v41 = vsel %vm39, %v23, 0
  %vm43 = vcmask 1041408
  %v45 = vsel %vm43, %v25, 0
  %47 = vmatpush.msra.mxu0 0.0
  %48 = vmatpush.msra.mxu0 0.0
  %49 = vmatpush.msra.mxu0 0.0
  %50 = vmatpush.msra.mxu0 0.0
  %51 = vmatpush.msra.mxu0 0.0
  %52 = vmatpush.msra.mxu0 0.0
  %53 = vmatpush.msra.mxu0 0.0
  %54 = vmatpush.msra.mxu0 0.0
  %55 = vmatpush.msra.mxu0 0.0
  %56 = vmatpush.msra.mxu0 0.0
  %57 = vmatpush.msra.mxu0 0.0
  %58 = vmatpush.msra.mxu0 0.0
  %59 = vmatpush.msra.mxu0 0.0
  %60 = vmatpush.msra.mxu0 0.0
  %61 = vmatpush.msra.mxu0 %v45
  %62 = vmatpush.msra.mxu0 %v24
  %63 = vmatmul.f32.gmra.mxu0 %v41
  %v64 = vpop.f32.mrf.mxu0
  %v65 = vadd.f32 0.0, %v64
  %66 = vdwg.mxu0
  %vm67 = vcmask 815104
  %v68 = vsel %vm67, %v65, -inf
  %69 = vmax.xlane.f32.xlu0 %v68
  %v70 = vpop.xlane.xlu0 %69
  %v71 = vsub.f32 %v65, %v70
  %v72 = vmul.f32 %v71, 1.442695
  %v73 = vpow.pop %v72
  %v74 = vsel %vm67, %v73, 0.0
  %75 = vadd.xlane.f32.xlu0 %v74
  %v76 = vpop.xlane.xlu0 %75
  %v77 = vrcp.pop %v76
  %v78 = vmul.f32 %v76, %v77
  %v79 = vsub.f32 1.0, %v78
  %v80 = vmul.f32 %v77, %v79
  %v81 = vadd.f32 %v77, %v80
  %vm82 = vweird.f32 %v76
  %vm83 = vweird.f32 %v77
  %vm84 = vmor %vm82, %vm83
  %v85 = vsel %vm84, %v77, %v81
  %v86 = vand.u32 2147483647, %v76
  %vm87 = vcmp.eq.f32.partialorder %v86, 8.507059e+37
  %v88 = vand.u32 %v76, 2147483648
  %v89 = vor.u32 1.1754944e-38, %v88
  %v90 = vsel %vm87, %v89, %v85
  %v91 = vmul.f32 %v90, 1.4285715
  %v92 = vmul.f32 %v73, %v91
  %s93 = smul.u32 0, 1000
  %v94 = vstv %s93
  %v95 = vadd.s32 %v21, %v94
  %v96 = vmul.u32 %v95, 2654435769
  %s97 = smul.u32 %s22, 843314857
  %v98 = vstv %s97
  %v99 = vadd.s32 %v96, %v98
  %v100 = vshrl.u32 %v99, 16
  %v101 = vxor.u32 %v99, %v100
  %v102 = vmul.u32 %v101, 2246822507
  %v103 = vshrl.u32 %v102, 13
  %v104 = vxor.u32 %v102, %v103
  %v105 = vmul.u32 %v104, 3266489909
  %v106 = vshrl.u32 %v105, 16
  %v107 = vxor.u32 %v105, %v106
  %vm108 = vcmp.lt.s32.totalorder %v107, 3435973837
  %v109 = vsel %vm108, 0.0, %v92
  %vm110 = vcmask 818176
  %v112 = vsel %vm110, %v109, 0
  %vm114 = vcmask 1043456
  %v116 = vsel %vm114, %v38, 0
  %118 = vmatpush.msra.mxu0 0.0
  %119 = vmatpush.msra.mxu0 0.0
  %120 = vmatpush.msra.mxu0 0.0
  %121 = vmatpush.msra.mxu0 %v116
  %122 = vmatpush.msra.mxu0 %v37
  %123 = vmatpush.msra.mxu0 %v36
  %124 = vmatpush.msra.mxu0 %v35
  %125 = vmatpush.msra.mxu0 %v34
  %126 = vmatpush.msra.mxu0 %v33
  %127 = vmatpush.msra.mxu0 %v32
  %128 = vmatpush.msra.mxu0 %v31
  %129 = vmatpush.msra.mxu0 %v30
  %130 = vmatpush.msra.mxu0 %v29
  %131 = vmatpush.msra.mxu0 %v28
  %132 = vmatpush.msra.mxu0 %v27
  %133 = vmatpush.msra.mxu0 %v26
  %134 = vmatmul.f32.gmra.mxu0 %v112
  %v135 = vpop.f32.mrf.mxu0
  %v136 = vadd.f32 0.0, %v135
  %137 = vdwg.mxu0
  %vm138 = vcmask 159744
  %139 = vst.msk [vmem:[%s4] sm:$0x1f] %vm138, %v136
  %s140 = scalar_lea.vmem %s1, 8
  %v141 = vld [vmem:[%s140] sm:$0x1f]
  %s142 = scalar_lea.vmem %s2, 16
  %v143 = vld [vmem:[%s142] sm:$0xff]
  %v144 = vld [vmem:[%s142 + $0x8] sm:$0x3]
  %s145 = scalar_lea.vmem %s3, 104
  %v146 = vld [vmem:[%s145] sm:$0xff]
  %v147 = vld [vmem:[%s145 + $0x8] sm:$0xff]
  %v148 = vld [vmem:[%s145 + $0x10] sm:$0xff]
  %v149 = vld [vmem:[%s145 + $0x18] sm:$0xff]
  %v150 = vld [vmem:[%s145 + $0x20] sm:$0xff]
  %v151 = vld [vmem:[%s145 + $0x28] sm:$0xff]
  %v152 = vld [vmem:[%s145 + $0x30] sm:$0xff]
  %v153 = vld [vmem:[%s145 + $0x38] sm:$0xff]
  %v154 = vld [vmem:[%s145 + $0x40] sm:$0xff]
  %v155 = vld [vmem:[%s145 + $0x48] sm:$0xff]
  %v156 = vld [vmem:[%s145 + $0x50] sm:$0xff]
  %v157 = vld [vmem:[%s145 + $0x58] sm:$0xff]
  %v158 = vld [vmem:[%s145 + $0x60] sm:$0xf]
  %v160 = vsel %vm39, %v141, 0
  %v163 = vsel %vm43, %v144, 0
  %165 = vmatpush.msra.mxu0 0.0
  %166 = vmatpush.msra.mxu0 0.0
  %167 = vmatpush.msra.mxu0 0.0
  %168 = vmatpush.msra.mxu0 0.0
  %169 = vmatpush.msra.mxu0 0.0
  %170 = vmatpush.msra.mxu0 0.0
  %171 = vmatpush.msra.mxu0 0.0
  %172 = vmatpush.msra.mxu0 0.0
  %173 = vmatpush.msra.mxu0 0.0
  %174 = vmatpush.msra.mxu0 0.0
  %175 = vmatpush.msra.mxu0 0.0
  %176 = vmatpush.msra.mxu0 0.0
  %177 = vmatpush.msra.mxu0 0.0
  %178 = vmatpush.msra.mxu0 0.0
  %179 = vmatpush.msra.mxu0 %v163
  %180 = vmatpush.msra.mxu0 %v143
  %181 = vmatmul.f32.gmra.mxu0 %v160
  %v182 = vpop.f32.mrf.mxu0
  %v183 = vadd.f32 0.0, %v182
  %184 = vdwg.mxu0
  %v185 = vsel %vm67, %v183, -inf
  %186 = vmax.xlane.f32.xlu0 %v185
  %v187 = vpop.xlane.xlu0 %186
  %v188 = vsub.f32 %v183, %v187
  %v189 = vmul.f32 %v188, 1.442695
  %v190 = vpow.pop %v189
  %v191 = vsel %vm67, %v190, 0.0
  %192 = vadd.xlane.f32.xlu0 %v191
  %v193 = vpop.xlane.xlu0 %192
  %v194 = vrcp.pop %v193
  %v195 = vmul.f32 %v193, %v194
  %v196 = vsub.f32 1.0, %v195
  %v197 = vmul.f32 %v194, %v196
  %v198 = vadd.f32 %v194, %v197
  %vm199 = vweird.f32 %v193
  %vm200 = vweird.f32 %v194
  %vm201 = vmor %vm199, %vm200
  %v202 = vsel %vm201, %v194, %v198
  %v203 = vand.u32 2147483647, %v193
  %vm204 = vcmp.eq.f32.partialorder %v203, 8.507059e+37
  %v205 = vand.u32 %v193, 2147483648
  %v206 = vor.u32 1.1754944e-38, %v205
  %v207 = vsel %vm204, %v206, %v202
  %v208 = vmul.f32 %v207, 1.4285715
  %v209 = vmul.f32 %v190, %v208
  %s210 = smul.u32 0, 2
  %s211 = sadd.s32 %s210, 1
  %s212 = smul.u32 %s211, 500
  %v213 = vstv %s212
  %v214 = vadd.s32 %v21, %v213
  %v215 = vmul.u32 %v214, 2654435769
  %v216 = vadd.s32 %v215, %v98
  %v217 = vshrl.u32 %v216, 16
  %v218 = vxor.u32 %v216, %v217
  %v219 = vmul.u32 %v218, 2246822507
  %v220 = vshrl.u32 %v219, 13
  %v221 = vxor.u32 %v219, %v220
  %v222 = vmul.u32 %v221, 3266489909
  %v223 = vshrl.u32 %v222, 16
  %v224 = vxor.u32 %v222, %v223
  %vm225 = vcmp.lt.s32.totalorder %v224, 3435973837
  %v226 = vsel %vm225, 0.0, %v209
  %v228 = vsel %vm110, %v226, 0
  %v231 = vsel %vm114, %v158, 0
  %233 = vmatpush.msra.mxu0 0.0
  %234 = vmatpush.msra.mxu0 0.0
  %235 = vmatpush.msra.mxu0 0.0
  %236 = vmatpush.msra.mxu0 %v231
  %237 = vmatpush.msra.mxu0 %v157
  %238 = vmatpush.msra.mxu0 %v156
  %239 = vmatpush.msra.mxu0 %v155
  %240 = vmatpush.msra.mxu0 %v154
  %241 = vmatpush.msra.mxu0 %v153
  %242 = vmatpush.msra.mxu0 %v152
  %243 = vmatpush.msra.mxu0 %v151
  %244 = vmatpush.msra.mxu0 %v150
  %245 = vmatpush.msra.mxu0 %v149
  %246 = vmatpush.msra.mxu0 %v148
  %247 = vmatpush.msra.mxu0 %v147
  %248 = vmatpush.msra.mxu0 %v146
  %249 = vmatmul.f32.gmra.mxu0 %v228
  %v250 = vpop.f32.mrf.mxu0
  %v251 = vadd.f32 0.0, %v250
  %252 = vdwg.mxu0
  %s253 = scalar_lea.vmem %s4, 8
  %254 = vst.msk [vmem:[%s253] sm:$0x1f] %vm138, %v251
  // Predicated region
  $region14: #{tpu_custom_call.1} parent=0 // pred_check
    _
  $region15: #{tpu_custom_call.1} parent=0 // pred_check_branch
    %256 = sbr.rel (0) target = $region17
  $region16: #{tpu_custom_call.1} parent=0 // pred_region
    _
  $region17: #{tpu_custom_call.1} parent=0 // pred_fallthru
    _
  // Predicated region
  $region18: #{tpu_custom_call.1} parent=0 // pred_check
    _
  $region19: #{tpu_custom_call.1} parent=0 // pred_check_branch
    %258 = sbr.rel (0) target = $region21
  $region20: #{tpu_custom_call.1} parent=0 // pred_region
    _
  $region21: #{tpu_custom_call.1} parent=0 // pred_fallthru
    _

</llo_original>
